<compile_context>
chip_gen: v6e
topology: v6e:2x2x1
jax: 0.10.0
libtpu: 0.0.40
codegen_flags: <defaults>
</compile_context>

<pallas_src>
import jax
import jax.numpy as jnp
from jax.experimental import pallas as pl
from jax.experimental.pallas import tpu as pltpu


def _round_up(x, m):
    return (x + m - 1) // m * m


def _conv_matmul_kernel(w_ref, p_ref, o_ref):
    # One (image, M-tile) step: (O, K) @ (K, TM) -> (O, TM),
    # bf16 operands on the MXU, f32 accumulation, cast on the store.
    o_ref[0] = jnp.dot(
        w_ref[...], p_ref[0], preferred_element_type=jnp.float32
    ).astype(o_ref.dtype)


def conv2d_pallas(x, weight, stride=2, out_dtype=jnp.float32):
    """Conv2d, stride `stride`, VALID padding, no bias.

    x: (N, C, H, W) NCHW, weight: (O, C, KH, KW) OIHW.  Returns (N, O, OH, OW).
    """
    N, C, H, W = x.shape
    O, Cw, KH, KW = weight.shape
    assert C == Cw
    OH = (H - KH) // stride + 1
    OW = (W - KW) // stride + 1
    M = OH * OW                      # per-image spatial size (lane dim)
    K = KH * KW * C                  # contraction dim (27)

    # ---- glue: im2col^T straight from NCHW, bf16, kernel-ready layout --------
    # patches_t[n, (kh*KW+kw)*C + c, oh*OW + ow] = x[n, c, oh*s+kh, ow*s+kw]
    xb = x.astype(jnp.bfloat16)
    taps = [
        xb[:, :, kh:kh + stride * (OH - 1) + 1:stride,
               kw:kw + stride * (OW - 1) + 1:stride]
        for kh in range(KH) for kw in range(KW)
    ]                                               # each (N, C, OH, OW)
    patches_t = jnp.stack(taps, axis=1).reshape(N, K, M)        # (N, 27, M)

    # Weight columns in matching (kh, kw, c) order: (O, K), bf16.
    w_t = jnp.transpose(weight, (0, 2, 3, 1)).reshape(O, K).astype(jnp.bfloat16)

    # ---- M tiling -------------------------------------------------------------
    # Small images: a single full-extent tile (block dim == array dim is legal
    # for any size, so no 128-padding and no extra pad pass).
    # Large images: big 128-aligned tiles (multiples of 512), aiming for >=8
    # grid steps along M so v7x's two TensorCores and the software pipeline
    # both stay busy, while amortizing the ~0.35 us per-step overhead.
    if M <= 4096:
        TM = M
        M_pad = M
    else:
        TM = min(8192, max(512, _round_up(pl.cdiv(M, 8), 512)))
        M_pad = _round_up(M, TM)
        if M_pad != M:
            patches_t = jnp.pad(patches_t, ((0, 0), (0, 0), (0, M_pad - M)))

    grid = (N, M_pad // TM)

    out_itemsize = jnp.dtype(out_dtype).itemsize
    cost = pl.CostEstimate(
        flops=2 * N * M * K * O,
        transcendentals=0,
        bytes_accessed=int(patches_t.size * 2 + w_t.size * 2
                           + N * O * M_pad * out_itemsize),
    )

    out = pl.pallas_call(
        _conv_matmul_kernel,
        out_shape=jax.ShapeDtypeStruct((N, O, M_pad), out_dtype),
        grid=grid,
        in_specs=[
            pl.BlockSpec((O, K), lambda n, m: (0, 0)),       # weight, resident
            pl.BlockSpec((1, K, TM), lambda n, m: (n, 0, m)),  # patches^T tile
        ],
        out_specs=pl.BlockSpec((1, O, TM), lambda n, m: (n, 0, m)),
        compiler_params=pltpu.CompilerParams(
            dimension_semantics=("parallel", "parallel"),
            # Tiny working set (<~10 MiB even at TM=8192); 32 MiB is safe on
            # v5e/v6e (128 MiB physical) and leaves headroom on v7x (64 MiB).
            vmem_limit_bytes=32 * 1024 * 1024),
        cost_estimate=cost,
    )(w_t, patches_t)

    if M_pad != M:
        out = out[:, :, :M]
    # (N, O, OH*OW) -> (N, O, OH, OW): metadata-only reshape, no transpose.
    return out.reshape(N, O, OH, OW)


@jax.jit
def toy_model_forward(x, weight):
    return conv2d_pallas(x, weight, stride=2, out_dtype=jnp.float32)


if __name__ == "__main__":
    key = jax.random.PRNGKey(0)
    kx, kw = jax.random.split(key)

    # Small NCHW input consistent with Conv2d(in_channels=3, ...)
    N, C, H, W = 2, 3, 16, 16
    x = jax.random.normal(kx, (N, C, H, W), dtype=jnp.float32)

    # Deterministic weight init, mimicking PyTorch's kaiming-uniform bound.
    O, KH, KW = 64, 3, 3
    fan_in = C * KH * KW
    bound = 1.0 / (fan_in ** 0.5)
    weight = jax.random.uniform(kw, (O, C, KH, KW),
                                minval=-bound, maxval=bound, dtype=jnp.float32)

    out = jax.block_until_ready(toy_model_forward(x, weight))

    OH = (H - KH) // 2 + 1
    OW = (W - KW) // 2 + 1
    assert out.shape == (N, O, OH, OW), out.shape
    assert out.dtype == jnp.float32

    # Reference with the same bf16-rounded operands (the kernel runs the MXU in
    # bf16 with f32 accumulation), stride 2, VALID padding, no bias.
    xb = x.astype(jnp.bfloat16).astype(jnp.float32)
    wb = weight.astype(jnp.bfloat16).astype(jnp.float32)
    ref = jax.lax.conv_general_dilated(
        xb, wb, window_strides=(2, 2), padding="VALID",
        dimension_numbers=("NCHW", "OIHW", "NCHW"))
    assert jnp.allclose(out, ref, atol=2e-2, rtol=2e-2), (
        float(jnp.max(jnp.abs(out - ref))))

    print("KERNEL_OK")
</pallas_src>

<mosaic_0001>
module attributes {stable_mosaic.version = 11 : i64} {
  func.func @_conv_matmul_kernel(%arg0: i32, %arg1: i32, %arg2: memref<64x27xbf16, #tpu.memory_space<vmem>>, %arg3: memref<1x27x49xbf16, #tpu.memory_space<vmem>>, %arg4: memref<1x64x49xf32, #tpu.memory_space<vmem>>) attributes {dimension_semantics = [#tpu.dimension_semantics<parallel>, #tpu.dimension_semantics<parallel>], iteration_bounds = array<i64: 2, 1>, scalar_prefetch = 0 : i64, scratch_operands = 0 : i64, tpu.core_type = #tpu.core_type<tc>, window_params = [{pipeline_mode = #tpu.pipeline_mode<synchronous>, transform_indices = @transform_0, window_bounds = array<i64: 64, 27>}, {transform_indices = @transform_1, window_bounds = array<i64: 1, 27, 49>}, {transform_indices = @transform_2, window_bounds = array<i64: 1, 64, 49>}]} {
    %c0 = arith.constant 0 : index
    %c0_0 = arith.constant 0 : index
    %0 = vector.load %arg2[%c0, %c0_0] : memref<64x27xbf16, #tpu.memory_space<vmem>>, vector<64x27xbf16>
    %c0_1 = arith.constant 0 : index
    %c0_2 = arith.constant 0 : index
    %c0_3 = arith.constant 0 : index
    %1 = vector.load %arg3[%c0_1, %c0_2, %c0_3] : memref<1x27x49xbf16, #tpu.memory_space<vmem>>, vector<1x27x49xbf16>
    %2 = vector.shape_cast %1 : vector<1x27x49xbf16> to vector<27x49xbf16>
    %cst = arith.constant dense<0.000000e+00> : vector<64x49xf32>
    %3 = tpu.matmul %0, %2, %cst {dimension_numbers = #tpu.dot_dimension_numbers<[1], [0], [0], [1], [0, 0, 1, 1], [], []>} : vector<64x27xbf16>, vector<27x49xbf16>, vector<64x49xf32> -> vector<64x49xf32>
    %c0_4 = arith.constant 0 : index
    %c0_5 = arith.constant 0 : index
    %c0_6 = arith.constant 0 : index
    %4 = vector.load %arg4[%c0_4, %c0_5, %c0_6] : memref<1x64x49xf32, #tpu.memory_space<vmem>>, vector<1x64x49xf32>
    %5 = vector.shape_cast %4 : vector<1x64x49xf32> to vector<64x49xf32>
    %6 = vector.shape_cast %3 : vector<64x49xf32> to vector<1x64x49xf32>
    tpu.vector_store %arg4[%c0_4, %c0_5, %c0_6], %6 {strides = array<i32>} : memref<1x64x49xf32, #tpu.memory_space<vmem>>, vector<1x64x49xf32>,
    return
  }
  func.func @transform_0(%arg0: i32, %arg1: i32) -> (i32, i32) {
    %c0_i32 = arith.constant 0 : i32
    %c0_i32_0 = arith.constant 0 : i32
    %c0_i32_1 = arith.constant 0 : i32
    return %c0_i32, %c0_i32_0 : i32, i32
  }
  func.func @transform_1(%arg0: i32, %arg1: i32) -> (i32, i32, i32) {
    %c0_i32 = arith.constant 0 : i32
    %c0_i32_0 = arith.constant 0 : i32
    return %arg0, %c0_i32, %arg1 : i32, i32, i32
  }
  func.func @transform_2(%arg0: i32, %arg1: i32) -> (i32, i32, i32) {
    %c0_i32 = arith.constant 0 : i32
    %c0_i32_0 = arith.constant 0 : i32
    return %arg0, %c0_i32, %arg1 : i32, i32, i32
  }
}

</mosaic_0001>

<llo_original>
// kernel: toy_model_forward.1
$region0: #{toy_model_forward.1}
  #allocation0 [shape = 'u32[]', space=smem, size = 0x4, offset = 0x4, fixed_abs, tag = 'smem constant byte address 0x4 - core index']
  #allocation1 [shape = 'u32[144,128]{1,0:T(1,128)}', space=vmem, size = 0x12000, scoped, tag = 'internal scratch']
  %s0 = inlined_call_operand.vmem [shape: bf16[64,27], index: 0, kind: input, shape index: {}]
  %s1 = inlined_call_operand.vmem [shape: bf16[2,27,49], index: 1, kind: input, shape index: {}]
  %s2 = inlined_call_operand.vmem [shape: f32[2,64,49], index: 2, kind: output, shape index: {}]
  %s3 = sld [smem:[#allocation0]]
  $region41: #{toy_model_forward.1} parent=0
    _
  %s5 = ssub.s32 1, %s3
  %s6 = scalar_select 0, %s5, %s3
  loop: start=0, step=1, limit=4
  $region2: #{toy_model_forward.1} parent=0 // loop_pre_header
    _
  $region3: #{toy_model_forward.1} parent=0 // loop_header
    %s8 = sphi 0, %s12
    %p9 = scmp.ge.s32.totalorder %s8, 4
    %s15 = sphi 0, %s27
    %s16 = sphi 0, %s23
    %s17 = sphi 0, %s15
    %s18 = sphi 0, %s16
    %s19 = sphi 0, %s17
    %s20 = sphi 0, %s18
    %s28 = sphi 0, %s28
    %s30 = sphi 0, %s28
    %s31 = sphi 0, %s30
    %s45 = sphi 0, %s31
    %s53 = sphi 0, %s55
    %s56 = sphi 0, %s53
    %s57 = sphi 0, %s56
    %s73 = sphi 0, %s57
    %s81 = sphi 0, %s83
    %s84 = sphi 0, %s81
    %s85 = sphi 0, %s84
    %s101 = sphi 0, %s85
  $region4: #{toy_model_forward.1} parent=0 // loop_header_branch
    %11 = sbr.rel (%p9) target = $region8
  $region5: #{toy_model_forward.1} parent=0 // loop_body
    %s13 = ssub.s32 %s8, 1
    %s14 = ssub.s32 %s8, 2
    %s21 = sadd.s32 1, %s16
    %p22 = scmp.ge.s32.totalorder %s21, 1
    %s23 = scalar_select %p22, 0, %s21
    %s24 = sadd.s32 1, %s15
    %s25 = scalar_select %p22, %s24, %s15
    %p26 = scmp.ge.s32.totalorder %s25, 2
    %s27 = scalar_select %p26, 0, %s25
    %s29 = sadd.s32 %s28, 1
    %p32 = scmp.eq.s32.totalorder %s8, 1
    %p33 = scmp.ne.s32.totalorder %s28, %s30
    %p34 = scmp.eq.s32.totalorder %s8, 0
    %p35 = por %p33, %p34
    %p36 = scmp.ne.s32.totalorder %s28, %s30
    %p37 = scmp.eq.s32.totalorder %s13, 1
    %p38 = por %p36, %p37
    %p39 = scmp.ne.s32.totalorder %s30, %s31
    %p40 = scmp.eq.s32.totalorder %s13, 0
    %p41 = por %p39, %p40
    %p42 = scmp.ne.s32.totalorder %s30, %s31
    %p43 = scmp.eq.s32.totalorder %s14, 1
    %p44 = por %p42, %p43
    %p46 = scmp.ne.s32.totalorder %s31, %s45
    %p47 = scmp.eq.s32.totalorder %s14, 0
    %p48 = por %p46, %p47
    %s49 = ssub.s32 %s15, %s27
    %s50 = ssub.s32 %s16, %s23
    %s51 = sor.u32 %s49, %s50
    %p52 = scmp.eq.s32.totalorder %s51, 0
    %s54 = sadd.s32 %s53, 1
    %s55 = scalar_select %p52, %s53, %s54
    %p58 = pneg %p52
    %p59 = scmp.eq.s32.totalorder %s8, 1
    %p60 = por %p58, %p59
    %p61 = scmp.ne.s32.totalorder %s53, %s56
    %p62 = scmp.eq.s32.totalorder %s8, 0
    %p63 = por %p61, %p62
    %p64 = scmp.ne.s32.totalorder %s53, %s56
    %p65 = scmp.eq.s32.totalorder %s13, 1
    %p66 = por %p64, %p65
    %p67 = scmp.ne.s32.totalorder %s56, %s57
    %p68 = scmp.eq.s32.totalorder %s13, 0
    %p69 = por %p67, %p68
    %p70 = scmp.ne.s32.totalorder %s56, %s57
    %p71 = scmp.eq.s32.totalorder %s14, 1
    %p72 = por %p70, %p71
    %p74 = scmp.ne.s32.totalorder %s57, %s73
    %p75 = scmp.eq.s32.totalorder %s14, 0
    %p76 = por %p74, %p75
    %s77 = ssub.s32 %s15, %s27
    %s78 = ssub.s32 %s16, %s23
    %s79 = sor.u32 %s77, %s78
    %p80 = scmp.eq.s32.totalorder %s79, 0
    %s82 = sadd.s32 %s81, 1
    %s83 = scalar_select %p80, %s81, %s82
    %p86 = pneg %p80
    %p87 = scmp.eq.s32.totalorder %s8, 1
    %p88 = por %p86, %p87
    %p89 = scmp.ne.s32.totalorder %s81, %s84
    %p90 = scmp.eq.s32.totalorder %s8, 0
    %p91 = por %p89, %p90
    %p92 = scmp.ne.s32.totalorder %s81, %s84
    %p93 = scmp.eq.s32.totalorder %s13, 1
    %p94 = por %p92, %p93
    %p95 = scmp.ne.s32.totalorder %s84, %s85
    %p96 = scmp.eq.s32.totalorder %s13, 0
    %p97 = por %p95, %p96
    %p98 = scmp.ne.s32.totalorder %s84, %s85
    %p99 = scmp.eq.s32.totalorder %s14, 1
    %p100 = por %p98, %p99
    %p102 = scmp.ne.s32.totalorder %s85, %s101
    %p103 = scmp.eq.s32.totalorder %s14, 0
    %p104 = por %p102, %p103
    %p105 = scmp.le.s32.totalorder 1, %s8
    %p106 = scmp.lt.s32.totalorder %s8, 3
    %p107 = pnand %p105, %p106
    %p108 = pneg %p107
    // Predicated region
    $region9: #{toy_model_forward.1} parent=5 // pred_check
      _
    $region10: #{toy_model_forward.1} parent=5 // pred_check_branch
      %110 = sbr.rel (%p107) target = $region12
    $region11: #{toy_model_forward.1} parent=5 // pred_region
      %s111 = ssub.s32 %s8, 1
      // Predicated region
      $region13: #{toy_model_forward.1} parent=11 // pred_check
        %p112 = pneg %p41
      $region14: #{toy_model_forward.1} parent=11 // pred_check_branch
        %114 = sbr.rel (%p112) target = $region16
      $region15: #{toy_model_forward.1} parent=11 // pred_region
        _
      $region16: #{toy_model_forward.1} parent=11 // pred_fallthru
        _
    $region12: #{toy_model_forward.1} parent=5 // pred_fallthru
      _
    %p115 = scmp.lt.s32.totalorder %s8, 2
    // Predicated region
    $region17: #{toy_model_forward.1} parent=5 // pred_check
      %p116 = pneg %p115
    $region18: #{toy_model_forward.1} parent=5 // pred_check_branch
      %118 = sbr.rel (%p116) target = $region20
    $region19: #{toy_model_forward.1} parent=5 // pred_region
      // Predicated region
      $region21: #{toy_model_forward.1} parent=19 // pred_check
        %p119 = pneg %p63
      $region22: #{toy_model_forward.1} parent=19 // pred_check_branch
        %121 = sbr.rel (%p119) target = $region24
      $region23: #{toy_model_forward.1} parent=19 // pred_region
        %p122 = scmp.lt.s32.totalorder %s15, 1
        %s123 = scalar_select %p122, %s15, 1
        %p124 = scmp.lt.s32.totalorder %s16, 0
        %s125 = scalar_select %p124, %s16, 0
        %s126 = smul.addr %s123, 4
        %s127 = sadd.s32 %s125, %s126
        %s128 = smul.addr %s127, 4
        %s129 = scalar_lea.vmem %s1, %s128
      $region24: #{toy_model_forward.1} parent=19 // pred_fallthru
        _
    $region20: #{toy_model_forward.1} parent=5 // pred_fallthru
      _
    %p130 = scmp.le.s32.totalorder 1, %s8
    %p131 = scmp.lt.s32.totalorder %s8, 3
    %p132 = pnand %p130, %p131
    %p133 = pneg %p132
    // Predicated region
    $region25: #{toy_model_forward.1} parent=5 // pred_check
      _
    $region26: #{toy_model_forward.1} parent=5 // pred_check_branch
      %135 = sbr.rel (%p132) target = $region28
    $region27: #{toy_model_forward.1} parent=5 // pred_region
      %s136 = ssub.s32 %s8, 1
      %p137 = pneg %p41
      %p138 = pneg %p38
      %p139 = scmp.lt.s32.totalorder %s17, 1
      %s140 = scalar_select %p139, %s17, 1
      %p141 = scmp.lt.s32.totalorder %s18, 0
      %s142 = scalar_select %p141, %s18, 0
      %s143 = smul.addr %s140, 4
      %s144 = sadd.s32 %s142, %s143
      %s145 = smul.addr %s144, 4
      %s146 = scalar_lea.vmem %s1, %s145
      %p147 = pneg %p69
      %p148 = pneg %p66
      %p149 = pneg %p97
      %p150 = pneg %p94
      %p151 = scmp.lt.s32.totalorder %s17, 1
      %s152 = scalar_select %p151, %s17, 1
      %p153 = scmp.lt.s32.totalorder %s18, 0
      %s154 = scalar_select %p153, %s18, 0
      %s155 = smul.addr %s152, 8
      %s156 = sadd.s32 %s154, %s155
      %s157 = smul.addr %s156, 8
      %s158 = scalar_lea.vmem %s2, %s157
      %p159 = scmp.lt.s32.totalorder %s17, 1
      %s160 = scalar_select %p159, %s17, 1
      %p161 = scmp.lt.s32.totalorder %s18, 0
      %s162 = scalar_select %p161, %s18, 0
      %s163 = smul.addr %s160, 4
      %s164 = sadd.s32 %s162, %s163
      %s165 = smul.addr %s164, 4
      %s166 = scalar_lea.vmem %s1, %s165
      %p167 = scmp.lt.s32.totalorder %s17, 1
      %s168 = scalar_select %p167, %s17, 1
      %p169 = scmp.lt.s32.totalorder %s18, 0
      %s170 = scalar_select %p169, %s18, 0
      %s171 = smul.addr %s168, 8
      %s172 = sadd.s32 %s170, %s171
      %s173 = smul.addr %s172, 8
      %s174 = scalar_lea.vmem %s2, %s173
      %v176 = vld [vmem:[%s0] sm:$0xf]
      %v177 = vld [vmem:[%s0 + $0x4] sm:$0xf]
      %v178 = vld [vmem:[%s0 + $0x8] sm:$0xf]
      %v179 = vld [vmem:[%s0 + $0xc] sm:$0xf]
      %v180 = vld [vmem:[%s0 + $0x10] sm:$0xf]
      %v181 = vld [vmem:[%s0 + $0x14] sm:$0xf]
      %v182 = vld [vmem:[%s0 + $0x18] sm:$0xf]
      %v183 = vld [vmem:[%s0 + $0x1c] sm:$0xf]
      %v184 = vld [vmem:[%s166] sm:$0xf]
      %v185 = vld [vmem:[%s166 + $0x4] sm:$0xf]
      %v186 = vld [vmem:[%s166 + $0x8] sm:$0xf]
      %v187 = vld [vmem:[%s166 + $0xc] sm:$0x3]
      %v196 = vunpack.c.l.b16 %v176
      %v197 = vunpack.c.l.b16 %v177
      %v198 = vunpack.c.l.b16 %v178
      %v199 = vunpack.c.l.b16 %v179
      %v200 = vunpack.c.l.b16 %v180
      %v201 = vunpack.c.l.b16 %v181
      %v202 = vunpack.c.l.b16 %v182
      %v203 = vunpack.c.l.b16 %v183
      %v204 = vpack.c.b16 %v197, %v196
      %v205 = vpack.c.b16 %v199, %v198
      %v206 = vpack.c.b16 %v201, %v200
      %v207 = vpack.c.b16 %v203, %v202
      %v212 = vunpack.c.l.b16 %v184
      %v213 = vunpack.c.l.b16 %v185
      %v214 = vunpack.c.l.b16 %v186
      %v215 = vunpack.c.l.b16 %v187
      %v216 = vpack.c.b16 %v213, %v212
      %v217 = vpack.c.b16 %v215, %v214
      %vm219 = vcmask 220160
      %v221 = vsel %vm219, %v204, 0
      %v224 = vsel %vm219, %v205, 0
      %v227 = vsel %vm219, %v206, 0
      %v230 = vsel %vm219, %v207, 0
      %vm232 = vcmask 1044480
      %vm233 = vcmask 1045504
      %v234 = vsel %vm232, 4294967295, 65535
      %v235 = vsel %vm233, %v234, 0
      %v237 = vand.u32 %v217, %v235
      %239 = vmatprep.subr.bf16.mxu0 0
      %240 = vmatpush1.bf16.msra.mxu0 0
      %241 = vmatprep.subr.bf16.mxu0 0
      %242 = vmatpush1.bf16.msra.mxu0 0
      %243 = vmatprep.subr.bf16.mxu0 0
      %244 = vmatpush1.bf16.msra.mxu0 0
      %245 = vmatprep.subr.bf16.mxu0 0
      %246 = vmatpush1.bf16.msra.mxu0 0
      %247 = vmatprep.subr.bf16.mxu0 0
      %248 = vmatpush1.bf16.msra.mxu0 0
      %249 = vmatprep.subr.bf16.mxu0 0
      %250 = vmatpush1.bf16.msra.mxu0 0
      %251 = vmatprep.subr.bf16.mxu0 0
      %252 = vmatpush1.bf16.msra.mxu0 %v237
      %253 = vmatprep.subr.bf16.mxu0 0
      %254 = vmatpush1.bf16.msra.mxu0 %v216
      %255 = vmatprep.subr.bf16.mxu0 0
      %256 = vmatpush2.bf16.msra.mxu0 0
      %257 = vmatprep.subr.bf16.mxu0 0
      %258 = vmatpush2.bf16.msra.mxu0 0
      %259 = vmatprep.subr.bf16.mxu0 0
      %260 = vmatpush2.bf16.msra.mxu0 0
      %261 = vmatprep.subr.bf16.mxu0 0
      %262 = vmatpush2.bf16.msra.mxu0 0
      %263 = vmatprep.subr.bf16.mxu0 0
      %264 = vmatpush2.bf16.msra.mxu0 0
      %265 = vmatprep.subr.bf16.mxu0 0
      %266 = vmatpush2.bf16.msra.mxu0 0
      %267 = vmatprep.subr.bf16.mxu0 0
      %268 = vmatpush2.bf16.msra.mxu0 0
      %269 = vmatprep.subr.bf16.mxu0 0
      %270 = vmatpush2.bf16.msra.mxu0 0
      %271 = vmatprep.mubr.bf16.mxu0 0
      %272 = vmatmul.mubr.bf16.gmra.mxu0 %v221
      %v273 = vpop.f32.mrf.mxu0
      %v274 = vadd.f32 0.0, %v273
      %v275 = vpop.f32.mrf.mxu0
      %v276 = vpop.f32.mrf.mxu0
      %v277 = vadd.f32 0.0, %v276
      %v278 = vpop.f32.mrf.mxu0
      %279 = vmatprep.mubr.bf16.mxu0 0
      %280 = vmatmul.mubr.bf16.gmra.mxu0 %v224
      %v281 = vpop.f32.mrf.mxu0
      %v282 = vadd.f32 0.0, %v281
      %v283 = vpop.f32.mrf.mxu0
      %v284 = vpop.f32.mrf.mxu0
      %v285 = vadd.f32 0.0, %v284
      %v286 = vpop.f32.mrf.mxu0
      %287 = vmatprep.mubr.bf16.mxu0 0
      %288 = vmatmul.mubr.bf16.gmra.mxu0 %v227
      %v289 = vpop.f32.mrf.mxu0
      %v290 = vadd.f32 0.0, %v289
      %v291 = vpop.f32.mrf.mxu0
      %v292 = vpop.f32.mrf.mxu0
      %v293 = vadd.f32 0.0, %v292
      %v294 = vpop.f32.mrf.mxu0
      %295 = vmatprep.mubr.bf16.mxu0 0
      %296 = vmatmul.mubr.bf16.gmra.mxu0 %v230
      %v297 = vpop.f32.mrf.mxu0
      %v298 = vadd.f32 0.0, %v297
      %v299 = vpop.f32.mrf.mxu0
      %v300 = vpop.f32.mrf.mxu0
      %v301 = vadd.f32 0.0, %v300
      %v302 = vpop.f32.mrf.mxu0
      %303 = vdwg.mxu0
      %vm304 = vcmask 400384
      %305 = vst.msk [vmem:[%s174] sm:$0xff] %vm304, %v274
      %306 = vst.msk [vmem:[%s174 + $0x8] sm:$0xff] %vm304, %v277
      %307 = vst.msk [vmem:[%s174 + $0x10] sm:$0xff] %vm304, %v282
      %308 = vst.msk [vmem:[%s174 + $0x18] sm:$0xff] %vm304, %v285
      %309 = vst.msk [vmem:[%s174 + $0x20] sm:$0xff] %vm304, %v290
      %310 = vst.msk [vmem:[%s174 + $0x28] sm:$0xff] %vm304, %v293
      %311 = vst.msk [vmem:[%s174 + $0x30] sm:$0xff] %vm304, %v298
      %312 = vst.msk [vmem:[%s174 + $0x38] sm:$0xff] %vm304, %v301
      %p313 = scmp.lt.s32.totalorder %s17, 1
      %s314 = scalar_select %p313, %s17, 1
      %p315 = scmp.lt.s32.totalorder %s18, 0
      %s316 = scalar_select %p315, %s18, 0
      %s317 = smul.addr %s314, 8
      %s318 = sadd.s32 %s316, %s317
      %s319 = smul.addr %s318, 8
      %s320 = scalar_lea.vmem %s2, %s319
      // Predicated region
      $region29: #{toy_model_forward.1} parent=27 // pred_check
        %p321 = pneg %p94
      $region30: #{toy_model_forward.1} parent=27 // pred_check_branch
        %323 = sbr.rel (%p321) target = $region32
      $region31: #{toy_model_forward.1} parent=27 // pred_region
        _
      $region32: #{toy_model_forward.1} parent=27 // pred_fallthru
        _
    $region28: #{toy_model_forward.1} parent=5 // pred_fallthru
      _
    %p324 = scmp.le.s32.totalorder 2, %s8
    // Predicated region
    $region33: #{toy_model_forward.1} parent=5 // pred_check
      %p325 = pneg %p324
    $region34: #{toy_model_forward.1} parent=5 // pred_check_branch
      %327 = sbr.rel (%p325) target = $region36
    $region35: #{toy_model_forward.1} parent=5 // pred_region
      %s328 = ssub.s32 %s8, 2
      // Predicated region
      $region37: #{toy_model_forward.1} parent=35 // pred_check
        %p329 = pneg %p100
      $region38: #{toy_model_forward.1} parent=35 // pred_check_branch
        %331 = sbr.rel (%p329) target = $region40
      $region39: #{toy_model_forward.1} parent=35 // pred_region
        %p332 = scmp.lt.s32.totalorder %s19, 1
        %s333 = scalar_select %p332, %s19, 1
        %p334 = scmp.lt.s32.totalorder %s20, 0
        %s335 = scalar_select %p334, %s20, 0
        %s336 = smul.addr %s333, 8
        %s337 = sadd.s32 %s335, %s336
        %s338 = smul.addr %s337, 8
        %s339 = scalar_lea.vmem %s2, %s338
      $region40: #{toy_model_forward.1} parent=35 // pred_fallthru
        _
    $region36: #{toy_model_forward.1} parent=5 // pred_fallthru
      _
  $region6: #{toy_model_forward.1} parent=0 // loop_footer
    %s12 = sadd.s32 1, %s8
  $region7: #{toy_model_forward.1} parent=0 // loop_footer_branch
    %7 = sbr.rel target = $region3
  $region8: #{toy_model_forward.1} parent=0 // loop_exit
    _

</llo_original>
